<compile_context>
chip_gen: v7x
topology: tpu7x:2x2x1
jax: 0.10.0
libtpu: 0.0.40
codegen_flags: <defaults>
</compile_context>

<pallas_src>
import functools

import jax
import jax.numpy as jnp
from jax.experimental import pallas as pl
from jax.experimental.pallas import tpu as pltpu


def _channel_attention_kernel(x_ref, w1t_ref, w2t_ref, out_ref, acc_ref, *, inv_hw):
    """Grid = (N, num_hw_tiles); axis 0 parallel over batch, axis 1 reduces HW."""
    k = pl.program_id(1)

    @pl.when(k == 0)
    def _init():
        acc_ref[...] = jnp.zeros_like(acc_ref)

    # Stream tile in native dtype, widen to f32, accumulate raw channel sums.
    x = x_ref[...].astype(jnp.float32)           # (1, C, HW_TILE)
    acc_ref[...] += jnp.sum(x, axis=-1)          # (1, C) f32 accumulator

    @pl.when(k == pl.num_programs(1) - 1)
    def _finalize():
        # Both pools in the reference module are AdaptiveAvgPool2d(1), so the
        # avg/max branches are identical: out = 2 * fc2(relu(fc1(mean(x)))).
        pooled = acc_ref[...] * inv_hw                                        # (1, C)
        h = jnp.dot(pooled, w1t_ref[...], preferred_element_type=jnp.float32)  # fc1
        h = jnp.maximum(h, 0.0)                                               # ReLU
        out = 2.0 * jnp.dot(h, w2t_ref[...], preferred_element_type=jnp.float32)  # fc2 (x2 branches)
        out_ref[...] = jax.nn.sigmoid(out).reshape(out_ref.shape)


def channel_attention(x, w1, w2, *, max_hw_tile=2048):
    """x: (N, C, H, W) NCHW, any float dtype; w1: (C//16, C) fc1; w2: (C, C//16) fc2."""
    N, C, H, W = x.shape
    HW = H * W
    hidden = w1.shape[0]

    # Pick the HW (lane) tile: multiple of 128, capped so 2 double-buffered
    # input blocks stay well under the scoped VMEM limit on all generations
    # (v7x included).  2 * C * 2048 * 4B = 4 MiB at C=512 f32 — comfortable.
    LANE = 128
    hw_pad = -(-HW // LANE) * LANE
    if hw_pad <= max_hw_tile:
        hw_tile = hw_pad
    else:
        hw_tile = max_hw_tile
        hw_pad = -(-HW // hw_tile) * hw_tile
    num_k = hw_pad // hw_tile

    # Keep x in its native dtype (the astype-to-f32 copy was the biggest cost).
    x_flat = x.reshape(N, C, HW)
    if hw_pad != HW:
        # Zero-pad spatial so tiles divide evenly; zeros don't change the sum.
        # TODO(synk): for large ragged HW, mask the last tile instead of padding.
        x_flat = jnp.pad(x_flat, ((0, 0), (0, 0), (0, hw_pad - HW)))

    w1t = jnp.transpose(w1).astype(jnp.float32)  # (C, hidden)
    w2t = jnp.transpose(w2).astype(jnp.float32)  # (hidden, C)

    itemsize = jnp.dtype(x.dtype).itemsize
    kernel = functools.partial(_channel_attention_kernel, inv_hw=1.0 / HW)

    out = pl.pallas_call(
        kernel,
        out_shape=jax.ShapeDtypeStruct((N, 1, C), jnp.float32),
        grid=(N, num_k),
        in_specs=[
            pl.BlockSpec((1, C, hw_tile), lambda i, k: (i, 0, k)),
            pl.BlockSpec((C, hidden), lambda i, k: (0, 0)),
            pl.BlockSpec((hidden, C), lambda i, k: (0, 0)),
        ],
        out_specs=pl.BlockSpec((1, 1, C), lambda i, k: (i, 0, 0)),
        scratch_shapes=[pltpu.VMEM((1, C), jnp.float32)],
        compiler_params=pltpu.CompilerParams(
            dimension_semantics=("parallel", "arbitrary"),
        ),
        cost_estimate=pl.CostEstimate(
            flops=4 * N * C * hidden,
            transcendentals=N * C,
            bytes_accessed=N * C * hw_pad * itemsize
            + (w1t.size + w2t.size + N * C) * 4,
        ),
    )(x_flat, w1t, w2t)

    return out.reshape(N, C, 1, 1).astype(x.dtype)


def channel_attention_ref(x, w1, w2):
    # Pure-JAX reference mirroring the PyTorch forward semantics.
    pooled = jnp.mean(x.astype(jnp.float32), axis=(2, 3))  # (N, C) — both pools are avg

    def mlp(p):
        h = jnp.maximum(p @ w1.T.astype(jnp.float32), 0.0)
        return h @ w2.T.astype(jnp.float32)

    out = mlp(pooled) + mlp(pooled)
    return jax.nn.sigmoid(out)[:, :, None, None].astype(x.dtype)


if __name__ == "__main__":
    # Case 1: inplanes=64, ratio=16 -> hidden=4; HW divisible by 128 (1 tile).
    N, C, H, W = 2, 64, 16, 16
    hidden = C // 16

    key = jax.random.PRNGKey(0)
    kx, k1, k2, kx2, k3, k4 = jax.random.split(key, 6)
    x = jax.random.normal(kx, (N, C, H, W), dtype=jnp.float32)
    w1 = jax.random.normal(k1, (hidden, C), dtype=jnp.float32) * (1.0 / jnp.sqrt(C))
    w2 = jax.random.normal(k2, (C, hidden), dtype=jnp.float32) * (1.0 / jnp.sqrt(hidden))

    out = channel_attention(x, w1, w2)
    jax.block_until_ready(out)
    ref = channel_attention_ref(x, w1, w2)
    assert out.shape == (N, C, 1, 1), out.shape
    assert jnp.allclose(out, ref, atol=1e-5, rtol=1e-5), "mismatch vs JAX reference (case 1)"

    # Case 2: ragged spatial (19x19 -> padded) + forced multi-tile reduction path.
    N2, C2, H2, W2 = 2, 32, 19, 19
    hid2 = C2 // 16
    x2 = jax.random.normal(kx2, (N2, C2, H2, W2), dtype=jnp.float32)
    w1b = jax.random.normal(k3, (hid2, C2), dtype=jnp.float32) * (1.0 / jnp.sqrt(C2))
    w2b = jax.random.normal(k4, (C2, hid2), dtype=jnp.float32) * (1.0 / jnp.sqrt(hid2))

    out2 = channel_attention(x2, w1b, w2b, max_hw_tile=128)  # 361 -> 3 tiles of 128
    jax.block_until_ready(out2)
    ref2 = channel_attention_ref(x2, w1b, w2b)
    assert out2.shape == (N2, C2, 1, 1), out2.shape
    assert jnp.allclose(out2, ref2, atol=1e-5, rtol=1e-5), "mismatch vs JAX reference (case 2)"

    print("KERNEL_OK")
</pallas_src>

<mosaic_0001>
module attributes {stable_mosaic.version = 11 : i64} {
  func.func @_channel_attention_kernel(%arg0: i32, %arg1: i32, %arg2: memref<1x64x256xf32, #tpu.memory_space<vmem>>, %arg3: memref<64x4xf32, #tpu.memory_space<vmem>>, %arg4: memref<4x64xf32, #tpu.memory_space<vmem>>, %arg5: memref<1x1x64xf32, #tpu.memory_space<vmem>>, %arg6: memref<1x64xf32, #tpu.memory_space<vmem>>) attributes {dimension_semantics = [#tpu.dimension_semantics<parallel>, #tpu.dimension_semantics<arbitrary>], iteration_bounds = array<i64: 2, 1>, scalar_prefetch = 0 : i64, scratch_operands = 1 : i64, tpu.core_type = #tpu.core_type<tc>, window_params = [{transform_indices = @transform_0, window_bounds = array<i64: 1, 64, 256>}, {pipeline_mode = #tpu.pipeline_mode<synchronous>, transform_indices = @transform_1, window_bounds = array<i64: 64, 4>}, {pipeline_mode = #tpu.pipeline_mode<synchronous>, transform_indices = @transform_2, window_bounds = array<i64: 4, 64>}, {transform_indices = @transform_3, window_bounds = array<i64: 1, 1, 64>}]} {
    %c0_i32 = arith.constant 0 : i32
    %0 = arith.cmpi eq, %arg1, %c0_i32 : i32
    %1 = arith.extui %0 : i1 to i32
    %c0_i32_0 = arith.constant 0 : i32
    %2 = arith.cmpi ne, %1, %c0_i32_0 : i32
    scf.if %2 {
      %cst_9 = arith.constant 0.000000e+00 : f32
      %11 = vector.broadcast %cst_9 : f32 to vector<1x64xf32>
      %c0_10 = arith.constant 0 : index
      %c0_11 = arith.constant 0 : index
      %12 = vector.load %arg6[%c0_10, %c0_11] : memref<1x64xf32, #tpu.memory_space<vmem>>, vector<1x64xf32>
      tpu.vector_store %arg6[%c0_10, %c0_11], %11 {strides = array<i32>} : memref<1x64xf32, #tpu.memory_space<vmem>>, vector<1x64xf32>,
    } else {
    }
    %c0 = arith.constant 0 : index
    %c0_1 = arith.constant 0 : index
    %c0_2 = arith.constant 0 : index
    %3 = vector.load %arg2[%c0, %c0_1, %c0_2] : memref<1x64x256xf32, #tpu.memory_space<vmem>>, vector<1x64x256xf32>
    %c0_3 = arith.constant 0 : index
    %c0_4 = arith.constant 0 : index
    %4 = vector.load %arg6[%c0_3, %c0_4] : memref<1x64xf32, #tpu.memory_space<vmem>>, vector<1x64xf32>
    %cst = arith.constant dense<0.000000e+00> : vector<1x64xf32>
    %5 = vector.multi_reduction <add>, %3, %cst [2] : vector<1x64x256xf32> to vector<1x64xf32>
    %6 = arith.addf %4, %5 : vector<1x64xf32>
    %c0_5 = arith.constant 0 : index
    %c0_6 = arith.constant 0 : index
    %7 = vector.load %arg6[%c0_5, %c0_6] : memref<1x64xf32, #tpu.memory_space<vmem>>, vector<1x64xf32>
    tpu.vector_store %arg6[%c0_5, %c0_6], %6 {strides = array<i32>} : memref<1x64xf32, #tpu.memory_space<vmem>>, vector<1x64xf32>,
    %c0_i32_7 = arith.constant 0 : i32
    %8 = arith.cmpi eq, %arg1, %c0_i32_7 : i32
    %9 = arith.extui %8 : i1 to i32
    %c0_i32_8 = arith.constant 0 : i32
    %10 = arith.cmpi ne, %9, %c0_i32_8 : i32
    scf.if %10 {
      %c0_9 = arith.constant 0 : index
      %c0_10 = arith.constant 0 : index
      %11 = vector.load %arg6[%c0_9, %c0_10] : memref<1x64xf32, #tpu.memory_space<vmem>>, vector<1x64xf32>
      %cst_11 = arith.constant 3.906250e-03 : f32
      %12 = vector.broadcast %cst_11 : f32 to vector<1x64xf32>
      %13 = arith.mulf %11, %12 : vector<1x64xf32>
      %c0_12 = arith.constant 0 : index
      %c0_13 = arith.constant 0 : index
      %14 = vector.load %arg3[%c0_12, %c0_13] : memref<64x4xf32, #tpu.memory_space<vmem>>, vector<64x4xf32>
      %cst_14 = arith.constant dense<0.000000e+00> : vector<1x4xf32>
      %15 = tpu.matmul %13, %14, %cst_14 {dimension_numbers = #tpu.dot_dimension_numbers<[1], [0], [0], [1], [0, 0, 1, 1], [], []>} : vector<1x64xf32>, vector<64x4xf32>, vector<1x4xf32> -> vector<1x4xf32>
      %cst_15 = arith.constant 0.000000e+00 : f32
      %16 = vector.broadcast %cst_15 : f32 to vector<1x4xf32>
      %17 = arith.maximumf %15, %16 : vector<1x4xf32>
      %c0_16 = arith.constant 0 : index
      %c0_17 = arith.constant 0 : index
      %18 = vector.load %arg4[%c0_16, %c0_17] : memref<4x64xf32, #tpu.memory_space<vmem>>, vector<4x64xf32>
      %cst_18 = arith.constant dense<0.000000e+00> : vector<1x64xf32>
      %19 = tpu.matmul %17, %18, %cst_18 {dimension_numbers = #tpu.dot_dimension_numbers<[1], [0], [0], [1], [0, 0, 1, 1], [], []>} : vector<1x4xf32>, vector<4x64xf32>, vector<1x64xf32> -> vector<1x64xf32>
      %cst_19 = arith.constant 2.000000e+00 : f32
      %20 = vector.broadcast %cst_19 : f32 to vector<1x64xf32>
      %21 = arith.mulf %20, %19 : vector<1x64xf32>
      %22 = arith.negf %21 : vector<1x64xf32>
      %23 = math.exp %22 : vector<1x64xf32>
      %cst_20 = arith.constant 1.000000e+00 : f32
      %24 = vector.broadcast %cst_20 : f32 to vector<1x64xf32>
      %25 = arith.addf %24, %23 : vector<1x64xf32>
      %26 = arith.divf %24, %25 : vector<1x64xf32>
      %27 = vector.shape_cast %26 : vector<1x64xf32> to vector<1x1x64xf32>
      %c0_21 = arith.constant 0 : index
      %c0_22 = arith.constant 0 : index
      %c0_23 = arith.constant 0 : index
      %28 = vector.load %arg5[%c0_21, %c0_22, %c0_23] : memref<1x1x64xf32, #tpu.memory_space<vmem>>, vector<1x1x64xf32>
      tpu.vector_store %arg5[%c0_21, %c0_22, %c0_23], %27 {strides = array<i32>} : memref<1x1x64xf32, #tpu.memory_space<vmem>>, vector<1x1x64xf32>,
    } else {
    }
    return
  }
  func.func @transform_0(%arg0: i32, %arg1: i32) -> (i32, i32, i32) {
    %c0_i32 = arith.constant 0 : i32
    %c0_i32_0 = arith.constant 0 : i32
    return %arg0, %c0_i32, %arg1 : i32, i32, i32
  }
  func.func @transform_1(%arg0: i32, %arg1: i32) -> (i32, i32) {
    %c0_i32 = arith.constant 0 : i32
    %c0_i32_0 = arith.constant 0 : i32
    %c0_i32_1 = arith.constant 0 : i32
    return %c0_i32, %c0_i32_0 : i32, i32
  }
  func.func @transform_2(%arg0: i32, %arg1: i32) -> (i32, i32) {
    %c0_i32 = arith.constant 0 : i32
    %c0_i32_0 = arith.constant 0 : i32
    %c0_i32_1 = arith.constant 0 : i32
    return %c0_i32, %c0_i32_0 : i32, i32
  }
  func.func @transform_3(%arg0: i32, %arg1: i32) -> (i32, i32, i32) {
    %c0_i32 = arith.constant 0 : i32
    %c0_i32_0 = arith.constant 0 : i32
    %c0_i32_1 = arith.constant 0 : i32
    return %arg0, %c0_i32, %c0_i32_0 : i32, i32, i32
  }
}

</mosaic_0001>

<llo_original>
// kernel: tpu_custom_call.1
$region0: #{tpu_custom_call.1}
  #allocation0 [shape = 'u32[]', space=smem, size = 0x4, offset = 0x4, fixed_abs, tag = 'smem constant byte address 0x4 - core index']
  #allocation1 [shape = 'u32[144,128]{1,0:T(1,128)}', space=vmem, size = 0x12000, scoped, tag = 'internal scratch']
  #allocation2 [shape = 'f32[1,64]{1,0:T(1,128)}', space=vmem, size = 0x200, scoped, tag = 'scratch operand']
  %s0 = inlined_call_operand.hbm [shape: f32[2,64,256], index: 0, kind: input, shape index: {}]
  %s1 = inlined_call_operand.vmem [shape: f32[64,4], index: 1, kind: input, shape index: {}]
  %s2 = inlined_call_operand.vmem [shape: f32[4,64], index: 2, kind: input, shape index: {}]
  %s3 = inlined_call_operand.hbm [shape: f32[2,1,64], index: 3, kind: output, shape index: {}]
  %s4 = sld [smem:[#allocation0]]
  $region57: #{tpu_custom_call.1} parent=0
    _
  %s6 = ssub.s32 1, %s4
  %s7 = scalar_select 0, %s6, %s4
  $region1: #{tpu_custom_call.1} parent=0
    #allocation3 [shape = 'u8[131072]{0}', space=vmem, size = 0x20000, scoped, tag = 'input window, operand 0']
    #allocation4 [shape = 's32[2]{0}', space=sflag, size = 0x8, scoped, tag = 'scoped memory for tpu_custom_call.1']
    #allocation5 [shape = 's32[2]{0}', space=sflag, size = 0x8, scoped, tag = 'scoped memory for tpu_custom_call.1']
    #allocation6 [shape = 'u8[1024]{0}', space=vmem, size = 0x400, scoped, tag = 'output window, operand 0']
    %8 = vsyncpa [#allocation4], 0
    %s9 = scalar_lea.sflag [#allocation4], 1
    %10 = vsyncpa %s9, 0
    %11 = vsyncpa [#allocation5], 0
    %s12 = scalar_lea.sflag [#allocation5], 1
    %13 = vsyncpa %s12, 0
    loop: start=0, step=1, limit=4
    $region2: #{tpu_custom_call.1} parent=1 // loop_pre_header
      _
    $region3: #{tpu_custom_call.1} parent=1 // loop_header
      %s15 = sphi 0, %s19
      %p16 = scmp.ge.s32.totalorder %s15, 4
      %s22 = sphi 0, %s34
      %s23 = sphi 0, %s30
      %s24 = sphi 0, %s22
      %s25 = sphi 0, %s23
      %s26 = sphi 0, %s24
      %s27 = sphi 0, %s25
      %s39 = sphi 0, %s41
      %s42 = sphi 0, %s39
      %s43 = sphi 0, %s42
      %s59 = sphi 0, %s43
      %s63 = sphi 0, %s63
      %s65 = sphi 0, %s63
      %s66 = sphi 0, %s65
      %s80 = sphi 0, %s66
      %s84 = sphi 0, %s84
      %s86 = sphi 0, %s84
      %s87 = sphi 0, %s86
      %s101 = sphi 0, %s87
      %s107 = sphi 0, %s109
      %s110 = sphi 0, %s107
      %s111 = sphi 0, %s110
      %s127 = sphi 0, %s111
    $region4: #{tpu_custom_call.1} parent=1 // loop_header_branch
      %18 = sbr.rel (%p16) target = $region8
    $region5: #{tpu_custom_call.1} parent=1 // loop_body
      %s20 = ssub.s32 %s15, 1
      %s21 = ssub.s32 %s15, 2
      %s28 = sadd.s32 1, %s23
      %p29 = scmp.ge.s32.totalorder %s28, 1
      %s30 = scalar_select %p29, 0, %s28
      %s31 = sadd.s32 1, %s22
      %s32 = scalar_select %p29, %s31, %s22
      %p33 = scmp.ge.s32.totalorder %s32, 2
      %s34 = scalar_select %p33, 0, %s32
      %s35 = ssub.s32 %s22, %s34
      %s36 = ssub.s32 %s23, %s30
      %s37 = sor.u32 %s35, %s36
      %p38 = scmp.eq.s32.totalorder %s37, 0
      %s40 = sadd.s32 %s39, 1
      %s41 = scalar_select %p38, %s39, %s40
      %p44 = pneg %p38
      %p45 = scmp.eq.s32.totalorder %s15, 1
      %p46 = por %p44, %p45
      %p47 = scmp.ne.s32.totalorder %s39, %s42
      %p48 = scmp.eq.s32.totalorder %s15, 0
      %p49 = por %p47, %p48
      %p50 = scmp.ne.s32.totalorder %s39, %s42
      %p51 = scmp.eq.s32.totalorder %s20, 1
      %p52 = por %p50, %p51
      %p53 = scmp.ne.s32.totalorder %s42, %s43
      %p54 = scmp.eq.s32.totalorder %s20, 0
      %p55 = por %p53, %p54
      %p56 = scmp.ne.s32.totalorder %s42, %s43
      %p57 = scmp.eq.s32.totalorder %s21, 1
      %p58 = por %p56, %p57
      %p60 = scmp.ne.s32.totalorder %s43, %s59
      %p61 = scmp.eq.s32.totalorder %s21, 0
      %p62 = por %p60, %p61
      %s64 = sadd.s32 %s63, 1
      %p67 = scmp.eq.s32.totalorder %s15, 1
      %p68 = scmp.ne.s32.totalorder %s63, %s65
      %p69 = scmp.eq.s32.totalorder %s15, 0
      %p70 = por %p68, %p69
      %p71 = scmp.ne.s32.totalorder %s63, %s65
      %p72 = scmp.eq.s32.totalorder %s20, 1
      %p73 = por %p71, %p72
      %p74 = scmp.ne.s32.totalorder %s65, %s66
      %p75 = scmp.eq.s32.totalorder %s20, 0
      %p76 = por %p74, %p75
      %p77 = scmp.ne.s32.totalorder %s65, %s66
      %p78 = scmp.eq.s32.totalorder %s21, 1
      %p79 = por %p77, %p78
      %p81 = scmp.ne.s32.totalorder %s66, %s80
      %p82 = scmp.eq.s32.totalorder %s21, 0
      %p83 = por %p81, %p82
      %s85 = sadd.s32 %s84, 1
      %p88 = scmp.eq.s32.totalorder %s15, 1
      %p89 = scmp.ne.s32.totalorder %s84, %s86
      %p90 = scmp.eq.s32.totalorder %s15, 0
      %p91 = por %p89, %p90
      %p92 = scmp.ne.s32.totalorder %s84, %s86
      %p93 = scmp.eq.s32.totalorder %s20, 1
      %p94 = por %p92, %p93
      %p95 = scmp.ne.s32.totalorder %s86, %s87
      %p96 = scmp.eq.s32.totalorder %s20, 0
      %p97 = por %p95, %p96
      %p98 = scmp.ne.s32.totalorder %s86, %s87
      %p99 = scmp.eq.s32.totalorder %s21, 1
      %p100 = por %p98, %p99
      %p102 = scmp.ne.s32.totalorder %s87, %s101
      %p103 = scmp.eq.s32.totalorder %s21, 0
      %p104 = por %p102, %p103
      %s105 = ssub.s32 %s22, %s34
      %p106 = scmp.eq.s32.totalorder %s105, 0
      %s108 = sadd.s32 %s107, 1
      %s109 = scalar_select %p106, %s107, %s108
      %p112 = pneg %p106
      %p113 = scmp.eq.s32.totalorder %s15, 1
      %p114 = por %p112, %p113
      %p115 = scmp.ne.s32.totalorder %s107, %s110
      %p116 = scmp.eq.s32.totalorder %s15, 0
      %p117 = por %p115, %p116
      %p118 = scmp.ne.s32.totalorder %s107, %s110
      %p119 = scmp.eq.s32.totalorder %s20, 1
      %p120 = por %p118, %p119
      %p121 = scmp.ne.s32.totalorder %s110, %s111
      %p122 = scmp.eq.s32.totalorder %s20, 0
      %p123 = por %p121, %p122
      %p124 = scmp.ne.s32.totalorder %s110, %s111
      %p125 = scmp.eq.s32.totalorder %s21, 1
      %p126 = por %p124, %p125
      %p128 = scmp.ne.s32.totalorder %s111, %s127
      %p129 = scmp.eq.s32.totalorder %s21, 0
      %p130 = por %p128, %p129
      %p131 = scmp.le.s32.totalorder 1, %s15
      %p132 = scmp.lt.s32.totalorder %s15, 3
      %p133 = pnand %p131, %p132
      %p134 = pneg %p133
      // Predicated region
      $region9: #{tpu_custom_call.1} parent=5 // pred_check
        _
      $region10: #{tpu_custom_call.1} parent=5 // pred_check_branch
        %136 = sbr.rel (%p133) target = $region12
      $region11: #{tpu_custom_call.1} parent=5 // pred_region
        %s137 = ssub.s32 %s15, 1
        // Predicated region
        $region13: #{tpu_custom_call.1} parent=11 // pred_check
          %p138 = pneg %p76
        $region14: #{tpu_custom_call.1} parent=11 // pred_check_branch
          %140 = sbr.rel (%p138) target = $region16
        $region15: #{tpu_custom_call.1} parent=11 // pred_region
          _
        $region16: #{tpu_custom_call.1} parent=11 // pred_fallthru
          _
        // Predicated region
        $region17: #{tpu_custom_call.1} parent=11 // pred_check
          %p141 = pneg %p97
        $region18: #{tpu_custom_call.1} parent=11 // pred_check_branch
          %143 = sbr.rel (%p141) target = $region20
        $region19: #{tpu_custom_call.1} parent=11 // pred_region
          _
        $region20: #{tpu_custom_call.1} parent=11 // pred_fallthru
          _
      $region12: #{tpu_custom_call.1} parent=5 // pred_fallthru
        _
      %p144 = scmp.lt.s32.totalorder %s15, 2
      // Predicated region
      $region21: #{tpu_custom_call.1} parent=5 // pred_check
        %p145 = pneg %p144
      $region22: #{tpu_custom_call.1} parent=5 // pred_check_branch
        %147 = sbr.rel (%p145) target = $region24
      $region23: #{tpu_custom_call.1} parent=5 // pred_region
        // Predicated region
        $region25: #{tpu_custom_call.1} parent=23 // pred_check
          %p148 = pneg %p49
        $region26: #{tpu_custom_call.1} parent=23 // pred_check_branch
          %150 = sbr.rel (%p148) target = $region28
        $region27: #{tpu_custom_call.1} parent=23 // pred_region
          %s151 = sand.u32 %s39, 1
          %s152 = scalar_lea.sflag [#allocation4], %s151
          %s153 = sand.u32 %s39, 1
          %s154 = smul.addr %s153, 128
          %s155 = scalar_lea.vmem [#allocation3], %s154
          %s156 = smul.u32 2, %s23
          %s158 = ssub.s32 2048, 2048
          %159 = vsyncadd %s152, %s158
          %s160 = smul.addr %s22, 16
          %s161 = sadd.s32 %s156, %s160
          %s162 = smul.addr %s161, 128
          %s163 = scalar_lea.hbm %s0, %s162
          %s164 = sshll.u32 %s155, 4
          %s165 = int_to_ptr.vmem [resolvable:$true] %s164
          %170 = dma.hbm_to_vmem [thread:$0]  %s163, 2048, %s165, %s152, 256, 256, 16
        $region28: #{tpu_custom_call.1} parent=23 // pred_fallthru
          _
      $region24: #{tpu_custom_call.1} parent=5 // pred_fallthru
        _
      %p171 = scmp.le.s32.totalorder 1, %s15
      %p172 = scmp.lt.s32.totalorder %s15, 3
      %p173 = pnand %p171, %p172
      %p174 = pneg %p173
      // Predicated region
      $region29: #{tpu_custom_call.1} parent=5 // pred_check
        _
      $region30: #{tpu_custom_call.1} parent=5 // pred_check_branch
        %176 = sbr.rel (%p173) target = $region32
      $region31: #{tpu_custom_call.1} parent=5 // pred_region
        %s177 = ssub.s32 %s15, 1
        %s178 = sand.u32 %s42, 1
        %s179 = scalar_lea.sflag [#allocation4], %s178
        %s180 = sand.u32 %s42, 1
        %s181 = smul.addr %s180, 128
        %s182 = scalar_lea.vmem [#allocation3], %s181
        // Predicated region
        $region33: #{tpu_custom_call.1} parent=31 // pred_check
          %p183 = pneg %p55
        $region34: #{tpu_custom_call.1} parent=31 // pred_check_branch
          %185 = sbr.rel (%p183) target = $region36
        $region35: #{tpu_custom_call.1} parent=31 // pred_region
          %186 = dma.done %s179, 2048
        $region36: #{tpu_custom_call.1} parent=31 // pred_fallthru
          _
        %s187 = sand.u32 %s42, 1
        %s188 = scalar_lea.sflag [#allocation4], %s187
        %s189 = sand.u32 %s42, 1
        %s190 = smul.addr %s189, 128
        %s191 = scalar_lea.vmem [#allocation3], %s190
        %p192 = pneg %p55
        %p193 = pneg %p52
        %p194 = pneg %p76
        %p195 = pneg %p73
        %p196 = pneg %p97
        %p197 = pneg %p94
        %p198 = pneg %p123
        %p199 = pneg %p120
        %s200 = sand.u32 %s110, 1
        %s201 = scalar_lea.sflag [#allocation5], %s200
        %s202 = sand.u32 %s110, 1
        %s203 = scalar_lea.vmem [#allocation6], %s202
        %s204 = smul.u32 2, %s25
        %p205 = scmp.eq.s32.totalorder %s25, 0
        // Predicated region
        $region37: #{tpu_custom_call.1} parent=31 // pred_check
          %p206 = pneg %p205
        $region38: #{tpu_custom_call.1} parent=31 // pred_check_branch
          %208 = sbr.rel (%p206) target = $region40
        $region39: #{tpu_custom_call.1} parent=31 // pred_region
          %vm209 = vcmask 516096
          %210 = vst.msk [vmem:[#allocation2] sm:$0x1] %vm209, 0.0
        $region40: #{tpu_custom_call.1} parent=31 // pred_fallthru
          _
        %v211 = vld [vmem:[%s182] sm:$0xff]
        %v212 = vld [vmem:[%s182 + $0x8] sm:$0xff]
        %v213 = vld [vmem:[%s182 + $0x10] sm:$0xff]
        %v214 = vld [vmem:[%s182 + $0x18] sm:$0xff]
        %v215 = vld [vmem:[%s182 + $0x20] sm:$0xff]
        %v216 = vld [vmem:[%s182 + $0x28] sm:$0xff]
        %v217 = vld [vmem:[%s182 + $0x30] sm:$0xff]
        %v218 = vld [vmem:[%s182 + $0x38] sm:$0xff]
        %v219 = vld [vmem:[%s182 + $0x40] sm:$0xff]
        %v220 = vld [vmem:[%s182 + $0x48] sm:$0xff]
        %v221 = vld [vmem:[%s182 + $0x50] sm:$0xff]
        %v222 = vld [vmem:[%s182 + $0x58] sm:$0xff]
        %v223 = vld [vmem:[%s182 + $0x60] sm:$0xff]
        %v224 = vld [vmem:[%s182 + $0x68] sm:$0xff]
        %v225 = vld [vmem:[%s182 + $0x70] sm:$0xff]
        %v226 = vld [vmem:[%s182 + $0x78] sm:$0xff]
        %v227 = vld [vmem:[#allocation2] sm:$0x1]
        %v228 = vadd.f32 %v211, %v212
        %229 = vadd.xlane.f32.xlu0 %v228
        %v230 = vpop.xlane.xlu0 %229
        %v231 = vadd.f32 %v213, %v214
        %232 = vadd.xlane.f32.xlu0 %v231
        %v233 = vpop.xlane.xlu0 %232
        %v234 = vadd.f32 %v215, %v216
        %235 = vadd.xlane.f32.xlu0 %v234
        %v236 = vpop.xlane.xlu0 %235
        %v237 = vadd.f32 %v217, %v218
        %238 = vadd.xlane.f32.xlu0 %v237
        %v239 = vpop.xlane.xlu0 %238
        %v240 = vadd.f32 %v219, %v220
        %241 = vadd.xlane.f32.xlu0 %v240
        %v242 = vpop.xlane.xlu0 %241
        %v243 = vadd.f32 %v221, %v222
        %244 = vadd.xlane.f32.xlu0 %v243
        %v245 = vpop.xlane.xlu0 %244
        %v246 = vadd.f32 %v223, %v224
        %247 = vadd.xlane.f32.xlu0 %v246
        %v248 = vpop.xlane.xlu0 %247
        %v249 = vadd.f32 %v225, %v226
        %250 = vadd.xlane.f32.xlu0 %v249
        %v251 = vpop.xlane.xlu0 %250
        %v260 = vlaneseq
        %v261 = vshrl.u32 %v260, 7
        %v262 = vsub.s32 0, %v261
        %v263 = vrot.slane %v230, %v262
        %v264 = vlaneseq
        %v265 = vshrl.u32 %v264, 7
        %v266 = vsub.s32 1, %v265
        %v267 = vrot.slane %v230, %v266
        %v268 = vlaneseq
        %v269 = vshrl.u32 %v268, 7
        %v270 = vsub.s32 2, %v269
        %v271 = vrot.slane %v230, %v270
        %v272 = vlaneseq
        %v273 = vshrl.u32 %v272, 7
        %v274 = vsub.s32 3, %v273
        %v275 = vrot.slane %v230, %v274
        %v276 = vlaneseq
        %v277 = vshrl.u32 %v276, 7
        %v278 = vsub.s32 4, %v277
        %v279 = vrot.slane %v230, %v278
        %v280 = vlaneseq
        %v281 = vshrl.u32 %v280, 7
        %v282 = vsub.s32 5, %v281
        %v283 = vrot.slane %v230, %v282
        %v284 = vlaneseq
        %v285 = vshrl.u32 %v284, 7
        %v286 = vsub.s32 6, %v285
        %v287 = vrot.slane %v230, %v286
        %v288 = vlaneseq
        %v289 = vshrl.u32 %v288, 7
        %v290 = vsub.s32 7, %v289
        %v291 = vrot.slane %v230, %v290
        %v292 = vlaneseq
        %v293 = vshrl.u32 %v292, 7
        %v294 = vsub.s32 0, %v293
        %v295 = vrot.slane %v233, %v294
        %v296 = vlaneseq
        %v297 = vshrl.u32 %v296, 7
        %v298 = vsub.s32 1, %v297
        %v299 = vrot.slane %v233, %v298
        %v300 = vlaneseq
        %v301 = vshrl.u32 %v300, 7
        %v302 = vsub.s32 2, %v301
        %v303 = vrot.slane %v233, %v302
        %v304 = vlaneseq
        %v305 = vshrl.u32 %v304, 7
        %v306 = vsub.s32 3, %v305
        %v307 = vrot.slane %v233, %v306
        %v308 = vlaneseq
        %v309 = vshrl.u32 %v308, 7
        %v310 = vsub.s32 4, %v309
        %v311 = vrot.slane %v233, %v310
        %v312 = vlaneseq
        %v313 = vshrl.u32 %v312, 7
        %v314 = vsub.s32 5, %v313
        %v315 = vrot.slane %v233, %v314
        %v316 = vlaneseq
        %v317 = vshrl.u32 %v316, 7
        %v318 = vsub.s32 6, %v317
        %v319 = vrot.slane %v233, %v318
        %v320 = vlaneseq
        %v321 = vshrl.u32 %v320, 7
        %v322 = vsub.s32 7, %v321
        %v323 = vrot.slane %v233, %v322
        %v324 = vlaneseq
        %v325 = vshrl.u32 %v324, 7
        %v326 = vsub.s32 0, %v325
        %v327 = vrot.slane %v236, %v326
        %v328 = vlaneseq
        %v329 = vshrl.u32 %v328, 7
        %v330 = vsub.s32 1, %v329
        %v331 = vrot.slane %v236, %v330
        %v332 = vlaneseq
        %v333 = vshrl.u32 %v332, 7
        %v334 = vsub.s32 2, %v333
        %v335 = vrot.slane %v236, %v334
        %v336 = vlaneseq
        %v337 = vshrl.u32 %v336, 7
        %v338 = vsub.s32 3, %v337
        %v339 = vrot.slane %v236, %v338
        %v340 = vlaneseq
        %v341 = vshrl.u32 %v340, 7
        %v342 = vsub.s32 4, %v341
        %v343 = vrot.slane %v236, %v342
        %v344 = vlaneseq
        %v345 = vshrl.u32 %v344, 7
        %v346 = vsub.s32 5, %v345
        %v347 = vrot.slane %v236, %v346
        %v348 = vlaneseq
        %v349 = vshrl.u32 %v348, 7
        %v350 = vsub.s32 6, %v349
        %v351 = vrot.slane %v236, %v350
        %v352 = vlaneseq
        %v353 = vshrl.u32 %v352, 7
        %v354 = vsub.s32 7, %v353
        %v355 = vrot.slane %v236, %v354
        %v356 = vlaneseq
        %v357 = vshrl.u32 %v356, 7
        %v358 = vsub.s32 0, %v357
        %v359 = vrot.slane %v239, %v358
        %v360 = vlaneseq
        %v361 = vshrl.u32 %v360, 7
        %v362 = vsub.s32 1, %v361
        %v363 = vrot.slane %v239, %v362
        %v364 = vlaneseq
        %v365 = vshrl.u32 %v364, 7
        %v366 = vsub.s32 2, %v365
        %v367 = vrot.slane %v239, %v366
        %v368 = vlaneseq
        %v369 = vshrl.u32 %v368, 7
        %v370 = vsub.s32 3, %v369
        %v371 = vrot.slane %v239, %v370
        %v372 = vlaneseq
        %v373 = vshrl.u32 %v372, 7
        %v374 = vsub.s32 4, %v373
        %v375 = vrot.slane %v239, %v374
        %v376 = vlaneseq
        %v377 = vshrl.u32 %v376, 7
        %v378 = vsub.s32 5, %v377
        %v379 = vrot.slane %v239, %v378
        %v380 = vlaneseq
        %v381 = vshrl.u32 %v380, 7
        %v382 = vsub.s32 6, %v381
        %v383 = vrot.slane %v239, %v382
        %v384 = vlaneseq
        %v385 = vshrl.u32 %v384, 7
        %v386 = vsub.s32 7, %v385
        %v387 = vrot.slane %v239, %v386
        %v388 = vlaneseq
        %v389 = vshrl.u32 %v388, 7
        %v390 = vsub.s32 0, %v389
        %v391 = vrot.slane %v242, %v390
        %v392 = vlaneseq
        %v393 = vshrl.u32 %v392, 7
        %v394 = vsub.s32 1, %v393
        %v395 = vrot.slane %v242, %v394
        %v396 = vlaneseq
        %v397 = vshrl.u32 %v396, 7
        %v398 = vsub.s32 2, %v397
        %v399 = vrot.slane %v242, %v398
        %v400 = vlaneseq
        %v401 = vshrl.u32 %v400, 7
        %v402 = vsub.s32 3, %v401
        %v403 = vrot.slane %v242, %v402
        %v404 = vlaneseq
        %v405 = vshrl.u32 %v404, 7
        %v406 = vsub.s32 4, %v405
        %v407 = vrot.slane %v242, %v406
        %v408 = vlaneseq
        %v409 = vshrl.u32 %v408, 7
        %v410 = vsub.s32 5, %v409
        %v411 = vrot.slane %v242, %v410
        %v412 = vlaneseq
        %v413 = vshrl.u32 %v412, 7
        %v414 = vsub.s32 6, %v413
        %v415 = vrot.slane %v242, %v414
        %v416 = vlaneseq
        %v417 = vshrl.u32 %v416, 7
        %v418 = vsub.s32 7, %v417
        %v419 = vrot.slane %v242, %v418
        %v420 = vlaneseq
        %v421 = vshrl.u32 %v420, 7
        %v422 = vsub.s32 0, %v421
        %v423 = vrot.slane %v245, %v422
        %v424 = vlaneseq
        %v425 = vshrl.u32 %v424, 7
        %v426 = vsub.s32 1, %v425
        %v427 = vrot.slane %v245, %v426
        %v428 = vlaneseq
        %v429 = vshrl.u32 %v428, 7
        %v430 = vsub.s32 2, %v429
        %v431 = vrot.slane %v245, %v430
        %v432 = vlaneseq
        %v433 = vshrl.u32 %v432, 7
        %v434 = vsub.s32 3, %v433
        %v435 = vrot.slane %v245, %v434
        %v436 = vlaneseq
        %v437 = vshrl.u32 %v436, 7
        %v438 = vsub.s32 4, %v437
        %v439 = vrot.slane %v245, %v438
        %v440 = vlaneseq
        %v441 = vshrl.u32 %v440, 7
        %v442 = vsub.s32 5, %v441
        %v443 = vrot.slane %v245, %v442
        %v444 = vlaneseq
        %v445 = vshrl.u32 %v444, 7
        %v446 = vsub.s32 6, %v445
        %v447 = vrot.slane %v245, %v446
        %v448 = vlaneseq
        %v449 = vshrl.u32 %v448, 7
        %v450 = vsub.s32 7, %v449
        %v451 = vrot.slane %v245, %v450
        %v452 = vlaneseq
        %v453 = vshrl.u32 %v452, 7
        %v454 = vsub.s32 0, %v453
        %v455 = vrot.slane %v248, %v454
        %v456 = vlaneseq
        %v457 = vshrl.u32 %v456, 7
        %v458 = vsub.s32 1, %v457
        %v459 = vrot.slane %v248, %v458
        %v460 = vlaneseq
        %v461 = vshrl.u32 %v460, 7
        %v462 = vsub.s32 2, %v461
        %v463 = vrot.slane %v248, %v462
        %v464 = vlaneseq
        %v465 = vshrl.u32 %v464, 7
        %v466 = vsub.s32 3, %v465
        %v467 = vrot.slane %v248, %v466
        %v468 = vlaneseq
        %v469 = vshrl.u32 %v468, 7
        %v470 = vsub.s32 4, %v469
        %v471 = vrot.slane %v248, %v470
        %v472 = vlaneseq
        %v473 = vshrl.u32 %v472, 7
        %v474 = vsub.s32 5, %v473
        %v475 = vrot.slane %v248, %v474
        %v476 = vlaneseq
        %v477 = vshrl.u32 %v476, 7
        %v478 = vsub.s32 6, %v477
        %v479 = vrot.slane %v248, %v478
        %v480 = vlaneseq
        %v481 = vshrl.u32 %v480, 7
        %v482 = vsub.s32 7, %v481
        %v483 = vrot.slane %v248, %v482
        %v484 = vlaneseq
        %v485 = vshrl.u32 %v484, 7
        %v486 = vsub.s32 0, %v485
        %v487 = vrot.slane %v251, %v486
        %v488 = vlaneseq
        %v489 = vshrl.u32 %v488, 7
        %v490 = vsub.s32 1, %v489
        %v491 = vrot.slane %v251, %v490
        %v492 = vlaneseq
        %v493 = vshrl.u32 %v492, 7
        %v494 = vsub.s32 2, %v493
        %v495 = vrot.slane %v251, %v494
        %v496 = vlaneseq
        %v497 = vshrl.u32 %v496, 7
        %v498 = vsub.s32 3, %v497
        %v499 = vrot.slane %v251, %v498
        %v500 = vlaneseq
        %v501 = vshrl.u32 %v500, 7
        %v502 = vsub.s32 4, %v501
        %v503 = vrot.slane %v251, %v502
        %v504 = vlaneseq
        %v505 = vshrl.u32 %v504, 7
        %v506 = vsub.s32 5, %v505
        %v507 = vrot.slane %v251, %v506
        %v508 = vlaneseq
        %v509 = vshrl.u32 %v508, 7
        %v510 = vsub.s32 6, %v509
        %v511 = vrot.slane %v251, %v510
        %v512 = vlaneseq
        %v513 = vshrl.u32 %v512, 7
        %v514 = vsub.s32 7, %v513
        %v515 = vrot.slane %v251, %v514
        %v516 = vcombine.low %v263, %v267
        %v517 = vcombine.low %v271, %v275
        %v518 = vcombine.low %v279, %v283
        %v519 = vcombine.low %v287, %v291
        %v521 = vunpack.c.l.s4 1966171168
        %v522 = vunpack.c.0.s8 %v521
        %v523 = vlaneseq
        %v524 = vshrl.u32 %v523, 7
        %v525 = vsub.s32 %v522, %v524
        %v526 = vrot.slane %v516, %v525
        %v528 = vunpack.c.l.s4 1966171168
        %v529 = vunpack.c.0.s8 %v528
        %v530 = vlaneseq
        %v531 = vshrl.u32 %v530, 7
        %v532 = vsub.s32 %v529, %v531
        %v533 = vrot.slane %v517, %v532
        %v535 = vunpack.c.l.s4 1966171168
        %v536 = vunpack.c.0.s8 %v535
        %v537 = vlaneseq
        %v538 = vshrl.u32 %v537, 7
        %v539 = vsub.s32 %v536, %v538
        %v540 = vrot.slane %v518, %v539
        %v542 = vunpack.c.l.s4 1966171168
        %v543 = vunpack.c.0.s8 %v542
        %v544 = vlaneseq
        %v545 = vshrl.u32 %v544, 7
        %v546 = vsub.s32 %v543, %v545
        %v547 = vrot.slane %v519, %v546
        %v548 = vcombine.low %v526, %v533
        %v549 = vcombine.low %v540, %v547
        %v551 = vunpack.c.l.s4 1966171168
        %v552 = vunpack.c.0.s8 %v551
        %v553 = vlaneseq
        %v554 = vshrl.u32 %v553, 7
        %v555 = vsub.s32 %v552, %v554
        %v556 = vrot.slane %v548, %v555
        %v558 = vunpack.c.l.s4 1966171168
        %v559 = vunpack.c.0.s8 %v558
        %v560 = vlaneseq
        %v561 = vshrl.u32 %v560, 7
        %v562 = vsub.s32 %v559, %v561
        %v563 = vrot.slane %v549, %v562
        %v564 = vcombine.low %v556, %v563
        %v565 = vcombine.low %v295, %v299
        %v566 = vcombine.low %v303, %v307
        %v567 = vcombine.low %v311, %v315
        %v568 = vcombine.low %v319, %v323
        %v570 = vunpack.c.l.s4 1966171168
        %v571 = vunpack.c.0.s8 %v570
        %v572 = vlaneseq
        %v573 = vshrl.u32 %v572, 7
        %v574 = vsub.s32 %v571, %v573
        %v575 = vrot.slane %v565, %v574
        %v577 = vunpack.c.l.s4 1966171168
        %v578 = vunpack.c.0.s8 %v577
        %v579 = vlaneseq
        %v580 = vshrl.u32 %v579, 7
        %v581 = vsub.s32 %v578, %v580
        %v582 = vrot.slane %v566, %v581
        %v584 = vunpack.c.l.s4 1966171168
        %v585 = vunpack.c.0.s8 %v584
        %v586 = vlaneseq
        %v587 = vshrl.u32 %v586, 7
        %v588 = vsub.s32 %v585, %v587
        %v589 = vrot.slane %v567, %v588
        %v591 = vunpack.c.l.s4 1966171168
        %v592 = vunpack.c.0.s8 %v591
        %v593 = vlaneseq
        %v594 = vshrl.u32 %v593, 7
        %v595 = vsub.s32 %v592, %v594
        %v596 = vrot.slane %v568, %v595
        %v597 = vcombine.low %v575, %v582
        %v598 = vcombine.low %v589, %v596
        %v600 = vunpack.c.l.s4 1966171168
        %v601 = vunpack.c.0.s8 %v600
        %v602 = vlaneseq
        %v603 = vshrl.u32 %v602, 7
        %v604 = vsub.s32 %v601, %v603
        %v605 = vrot.slane %v597, %v604
        %v607 = vunpack.c.l.s4 1966171168
        %v608 = vunpack.c.0.s8 %v607
        %v609 = vlaneseq
        %v610 = vshrl.u32 %v609, 7
        %v611 = vsub.s32 %v608, %v610
        %v612 = vrot.slane %v598, %v611
        %v613 = vcombine.low %v605, %v612
        %v614 = vcombine.low %v327, %v331
        %v615 = vcombine.low %v335, %v339
        %v616 = vcombine.low %v343, %v347
        %v617 = vcombine.low %v351, %v355
        %v619 = vunpack.c.l.s4 1966171168
        %v620 = vunpack.c.0.s8 %v619
        %v621 = vlaneseq
        %v622 = vshrl.u32 %v621, 7
        %v623 = vsub.s32 %v620, %v622
        %v624 = vrot.slane %v614, %v623
        %v626 = vunpack.c.l.s4 1966171168
        %v627 = vunpack.c.0.s8 %v626
        %v628 = vlaneseq
        %v629 = vshrl.u32 %v628, 7
        %v630 = vsub.s32 %v627, %v629
        %v631 = vrot.slane %v615, %v630
        %v633 = vunpack.c.l.s4 1966171168
        %v634 = vunpack.c.0.s8 %v633
        %v635 = vlaneseq
        %v636 = vshrl.u32 %v635, 7
        %v637 = vsub.s32 %v634, %v636
        %v638 = vrot.slane %v616, %v637
        %v640 = vunpack.c.l.s4 1966171168
        %v641 = vunpack.c.0.s8 %v640
        %v642 = vlaneseq
        %v643 = vshrl.u32 %v642, 7
        %v644 = vsub.s32 %v641, %v643
        %v645 = vrot.slane %v617, %v644
        %v646 = vcombine.low %v624, %v631
        %v647 = vcombine.low %v638, %v645
        %v649 = vunpack.c.l.s4 1966171168
        %v650 = vunpack.c.0.s8 %v649
        %v651 = vlaneseq
        %v652 = vshrl.u32 %v651, 7
        %v653 = vsub.s32 %v650, %v652
        %v654 = vrot.slane %v646, %v653
        %v656 = vunpack.c.l.s4 1966171168
        %v657 = vunpack.c.0.s8 %v656
        %v658 = vlaneseq
        %v659 = vshrl.u32 %v658, 7
        %v660 = vsub.s32 %v657, %v659
        %v661 = vrot.slane %v647, %v660
        %v662 = vcombine.low %v654, %v661
        %v663 = vcombine.low %v359, %v363
        %v664 = vcombine.low %v367, %v371
        %v665 = vcombine.low %v375, %v379
        %v666 = vcombine.low %v383, %v387
        %v668 = vunpack.c.l.s4 1966171168
        %v669 = vunpack.c.0.s8 %v668
        %v670 = vlaneseq
        %v671 = vshrl.u32 %v670, 7
        %v672 = vsub.s32 %v669, %v671
        %v673 = vrot.slane %v663, %v672
        %v675 = vunpack.c.l.s4 1966171168
        %v676 = vunpack.c.0.s8 %v675
        %v677 = vlaneseq
        %v678 = vshrl.u32 %v677, 7
        %v679 = vsub.s32 %v676, %v678
        %v680 = vrot.slane %v664, %v679
        %v682 = vunpack.c.l.s4 1966171168
        %v683 = vunpack.c.0.s8 %v682
        %v684 = vlaneseq
        %v685 = vshrl.u32 %v684, 7
        %v686 = vsub.s32 %v683, %v685
        %v687 = vrot.slane %v665, %v686
        %v689 = vunpack.c.l.s4 1966171168
        %v690 = vunpack.c.0.s8 %v689
        %v691 = vlaneseq
        %v692 = vshrl.u32 %v691, 7
        %v693 = vsub.s32 %v690, %v692
        %v694 = vrot.slane %v666, %v693
        %v695 = vcombine.low %v673, %v680
        %v696 = vcombine.low %v687, %v694
        %v698 = vunpack.c.l.s4 1966171168
        %v699 = vunpack.c.0.s8 %v698
        %v700 = vlaneseq
        %v701 = vshrl.u32 %v700, 7
        %v702 = vsub.s32 %v699, %v701
        %v703 = vrot.slane %v695, %v702
        %v705 = vunpack.c.l.s4 1966171168
        %v706 = vunpack.c.0.s8 %v705
        %v707 = vlaneseq
        %v708 = vshrl.u32 %v707, 7
        %v709 = vsub.s32 %v706, %v708
        %v710 = vrot.slane %v696, %v709
        %v711 = vcombine.low %v703, %v710
        %v712 = vcombine.low %v391, %v395
        %v713 = vcombine.low %v399, %v403
        %v714 = vcombine.low %v407, %v411
        %v715 = vcombine.low %v415, %v419
        %v717 = vunpack.c.l.s4 1966171168
        %v718 = vunpack.c.0.s8 %v717
        %v719 = vlaneseq
        %v720 = vshrl.u32 %v719, 7
        %v721 = vsub.s32 %v718, %v720
        %v722 = vrot.slane %v712, %v721
        %v724 = vunpack.c.l.s4 1966171168
        %v725 = vunpack.c.0.s8 %v724
        %v726 = vlaneseq
        %v727 = vshrl.u32 %v726, 7
        %v728 = vsub.s32 %v725, %v727
        %v729 = vrot.slane %v713, %v728
        %v731 = vunpack.c.l.s4 1966171168
        %v732 = vunpack.c.0.s8 %v731
        %v733 = vlaneseq
        %v734 = vshrl.u32 %v733, 7
        %v735 = vsub.s32 %v732, %v734
        %v736 = vrot.slane %v714, %v735
        %v738 = vunpack.c.l.s4 1966171168
        %v739 = vunpack.c.0.s8 %v738
        %v740 = vlaneseq
        %v741 = vshrl.u32 %v740, 7
        %v742 = vsub.s32 %v739, %v741
        %v743 = vrot.slane %v715, %v742
        %v744 = vcombine.low %v722, %v729
        %v745 = vcombine.low %v736, %v743
        %v747 = vunpack.c.l.s4 1966171168
        %v748 = vunpack.c.0.s8 %v747
        %v749 = vlaneseq
        %v750 = vshrl.u32 %v749, 7
        %v751 = vsub.s32 %v748, %v750
        %v752 = vrot.slane %v744, %v751
        %v754 = vunpack.c.l.s4 1966171168
        %v755 = vunpack.c.0.s8 %v754
        %v756 = vlaneseq
        %v757 = vshrl.u32 %v756, 7
        %v758 = vsub.s32 %v755, %v757
        %v759 = vrot.slane %v745, %v758
        %v760 = vcombine.low %v752, %v759
        %v761 = vcombine.low %v423, %v427
        %v762 = vcombine.low %v431, %v435
        %v763 = vcombine.low %v439, %v443
        %v764 = vcombine.low %v447, %v451
        %v766 = vunpack.c.l.s4 1966171168
        %v767 = vunpack.c.0.s8 %v766
        %v768 = vlaneseq
        %v769 = vshrl.u32 %v768, 7
        %v770 = vsub.s32 %v767, %v769
        %v771 = vrot.slane %v761, %v770
        %v773 = vunpack.c.l.s4 1966171168
        %v774 = vunpack.c.0.s8 %v773
        %v775 = vlaneseq
        %v776 = vshrl.u32 %v775, 7
        %v777 = vsub.s32 %v774, %v776
        %v778 = vrot.slane %v762, %v777
        %v780 = vunpack.c.l.s4 1966171168
        %v781 = vunpack.c.0.s8 %v780
        %v782 = vlaneseq
        %v783 = vshrl.u32 %v782, 7
        %v784 = vsub.s32 %v781, %v783
        %v785 = vrot.slane %v763, %v784
        %v787 = vunpack.c.l.s4 1966171168
        %v788 = vunpack.c.0.s8 %v787
        %v789 = vlaneseq
        %v790 = vshrl.u32 %v789, 7
        %v791 = vsub.s32 %v788, %v790
        %v792 = vrot.slane %v764, %v791
        %v793 = vcombine.low %v771, %v778
        %v794 = vcombine.low %v785, %v792
        %v796 = vunpack.c.l.s4 1966171168
        %v797 = vunpack.c.0.s8 %v796
        %v798 = vlaneseq
        %v799 = vshrl.u32 %v798, 7
        %v800 = vsub.s32 %v797, %v799
        %v801 = vrot.slane %v793, %v800
        %v803 = vunpack.c.l.s4 1966171168
        %v804 = vunpack.c.0.s8 %v803
        %v805 = vlaneseq
        %v806 = vshrl.u32 %v805, 7
        %v807 = vsub.s32 %v804, %v806
        %v808 = vrot.slane %v794, %v807
        %v809 = vcombine.low %v801, %v808
        %v810 = vcombine.low %v455, %v459
        %v811 = vcombine.low %v463, %v467
        %v812 = vcombine.low %v471, %v475
        %v813 = vcombine.low %v479, %v483
        %v815 = vunpack.c.l.s4 1966171168
        %v816 = vunpack.c.0.s8 %v815
        %v817 = vlaneseq
        %v818 = vshrl.u32 %v817, 7
        %v819 = vsub.s32 %v816, %v818
        %v820 = vrot.slane %v810, %v819
        %v822 = vunpack.c.l.s4 1966171168
        %v823 = vunpack.c.0.s8 %v822
        %v824 = vlaneseq
        %v825 = vshrl.u32 %v824, 7
        %v826 = vsub.s32 %v823, %v825
        %v827 = vrot.slane %v811, %v826
        %v829 = vunpack.c.l.s4 1966171168
        %v830 = vunpack.c.0.s8 %v829
        %v831 = vlaneseq
        %v832 = vshrl.u32 %v831, 7
        %v833 = vsub.s32 %v830, %v832
        %v834 = vrot.slane %v812, %v833
        %v836 = vunpack.c.l.s4 1966171168
        %v837 = vunpack.c.0.s8 %v836
        %v838 = vlaneseq
        %v839 = vshrl.u32 %v838, 7
        %v840 = vsub.s32 %v837, %v839
        %v841 = vrot.slane %v813, %v840
        %v842 = vcombine.low %v820, %v827
        %v843 = vcombine.low %v834, %v841
        %v845 = vunpack.c.l.s4 1966171168
        %v846 = vunpack.c.0.s8 %v845
        %v847 = vlaneseq
        %v848 = vshrl.u32 %v847, 7
        %v849 = vsub.s32 %v846, %v848
        %v850 = vrot.slane %v842, %v849
        %v852 = vunpack.c.l.s4 1966171168
        %v853 = vunpack.c.0.s8 %v852
        %v854 = vlaneseq
        %v855 = vshrl.u32 %v854, 7
        %v856 = vsub.s32 %v853, %v855
        %v857 = vrot.slane %v843, %v856
        %v858 = vcombine.low %v850, %v857
        %v859 = vcombine.low %v487, %v491
        %v860 = vcombine.low %v495, %v499
        %v861 = vcombine.low %v503, %v507
        %v862 = vcombine.low %v511, %v515
        %v864 = vunpack.c.l.s4 1966171168
        %v865 = vunpack.c.0.s8 %v864
        %v866 = vlaneseq
        %v867 = vshrl.u32 %v866, 7
        %v868 = vsub.s32 %v865, %v867
        %v869 = vrot.slane %v859, %v868
        %v871 = vunpack.c.l.s4 1966171168
        %v872 = vunpack.c.0.s8 %v871
        %v873 = vlaneseq
        %v874 = vshrl.u32 %v873, 7
        %v875 = vsub.s32 %v872, %v874
        %v876 = vrot.slane %v860, %v875
        %v878 = vunpack.c.l.s4 1966171168
        %v879 = vunpack.c.0.s8 %v878
        %v880 = vlaneseq
        %v881 = vshrl.u32 %v880, 7
        %v882 = vsub.s32 %v879, %v881
        %v883 = vrot.slane %v861, %v882
        %v885 = vunpack.c.l.s4 1966171168
        %v886 = vunpack.c.0.s8 %v885
        %v887 = vlaneseq
        %v888 = vshrl.u32 %v887, 7
        %v889 = vsub.s32 %v886, %v888
        %v890 = vrot.slane %v862, %v889
        %v891 = vcombine.low %v869, %v876
        %v892 = vcombine.low %v883, %v890
        %v894 = vunpack.c.l.s4 1966171168
        %v895 = vunpack.c.0.s8 %v894
        %v896 = vlaneseq
        %v897 = vshrl.u32 %v896, 7
        %v898 = vsub.s32 %v895, %v897
        %v899 = vrot.slane %v891, %v898
        %v901 = vunpack.c.l.s4 1966171168
        %v902 = vunpack.c.0.s8 %v901
        %v903 = vlaneseq
        %v904 = vshrl.u32 %v903, 7
        %v905 = vsub.s32 %v902, %v904
        %v906 = vrot.slane %v892, %v905
        %v907 = vcombine.low %v899, %v906
        %908 = vset.pattern.permute.xlu0 0
        %909 = vperm.xlu0 %908, %v564
        %v910 = vpop.permute.xlu0 %909
        %911 = vset.pattern.permute.xlu0 0
        %912 = vperm.xlu0 %911, %v613
        %v913 = vpop.permute.xlu0 %912
        %914 = vset.pattern.permute.xlu0 0
        %915 = vperm.xlu0 %914, %v662
        %v916 = vpop.permute.xlu0 %915
        %917 = vset.pattern.permute.xlu0 0
        %918 = vperm.xlu0 %917, %v711
        %v919 = vpop.permute.xlu0 %918
        %920 = vset.pattern.permute.xlu0 0
        %921 = vperm.xlu0 %920, %v760
        %v922 = vpop.permute.xlu0 %921
        %923 = vset.pattern.permute.xlu0 0
        %924 = vperm.xlu0 %923, %v809
        %v925 = vpop.permute.xlu0 %924
        %926 = vset.pattern.permute.xlu0 0
        %927 = vperm.xlu0 %926, %v858
        %v928 = vpop.permute.xlu0 %927
        %929 = vset.pattern.permute.xlu0 0
        %930 = vperm.xlu0 %929, %v907
        %v931 = vpop.permute.xlu0 %930
        %v932 = vlaneseq
        %v933 = vand.u32 %v932, 127
        %v934 = vlaneseq
        %v935 = vshrl.u32 %v934, 7
        %v936 = vsub.s32 %v933, %v935
        %v937 = vrot.slane %v910, %v936
        %v938 = vadd.s32 %v933, 4294967288
        %v939 = vlaneseq
        %v940 = vshrl.u32 %v939, 7
        %v941 = vsub.s32 %v938, %v940
        %v942 = vrot.slane %v913, %v941
        %vm943 = vcmask 130112
        %v944 = vsel %vm943, %v942, %v937
        %v945 = vadd.s32 %v933, 4294967280
        %v946 = vlaneseq
        %v947 = vshrl.u32 %v946, 7
        %v948 = vsub.s32 %v945, %v947
        %v949 = vrot.slane %v916, %v948
        %vm950 = vcmask 195712
        %v951 = vsel %vm950, %v949, %v944
        %v952 = vadd.s32 %v933, 4294967272
        %v953 = vlaneseq
        %v954 = vshrl.u32 %v953, 7
        %v955 = vsub.s32 %v952, %v954
        %v956 = vrot.slane %v919, %v955
        %vm957 = vcmask 261312
        %v958 = vsel %vm957, %v956, %v951
        %v959 = vadd.s32 %v933, 4294967264
        %v960 = vlaneseq
        %v961 = vshrl.u32 %v960, 7
        %v962 = vsub.s32 %v959, %v961
        %v963 = vrot.slane %v922, %v962
        %vm964 = vcmask 326912
        %v965 = vsel %vm964, %v963, %v958
        %v966 = vadd.s32 %v933, 4294967256
        %v967 = vlaneseq
        %v968 = vshrl.u32 %v967, 7
        %v969 = vsub.s32 %v966, %v968
        %v970 = vrot.slane %v925, %v969
        %vm971 = vcmask 392512
        %v972 = vsel %vm971, %v970, %v965
        %v973 = vadd.s32 %v933, 4294967248
        %v974 = vlaneseq
        %v975 = vshrl.u32 %v974, 7
        %v976 = vsub.s32 %v973, %v975
        %v977 = vrot.slane %v928, %v976
        %vm978 = vcmask 458112
        %v979 = vsel %vm978, %v977, %v972
        %v980 = vadd.s32 %v933, 4294967240
        %v981 = vlaneseq
        %v982 = vshrl.u32 %v981, 7
        %v983 = vsub.s32 %v980, %v982
        %v984 = vrot.slane %v931, %v983
        %vm985 = vcmask 523712
        %v986 = vsel %vm985, %v984, %v979
        %v988 = vunpack.c.l.s4 1966171168
        %v989 = vunpack.c.0.s8 %v988
        %v990 = vlaneseq
        %v991 = vshrl.u32 %v990, 7
        %v992 = vsub.s32 %v989, %v991
        %v993 = vrot.slane %v986, %v992
        %v995 = vunpack.c.l.s4 1966171168
        %v996 = vunpack.c.0.s8 %v995
        %v997 = vlaneseq
        %v998 = vshrl.u32 %v997, 7
        %v999 = vsub.s32 %v996, %v998
        %v1000 = vrot.slane %v993, %v999
        %v1002 = vadd.f32 %v227, %v1000
        %vm1003 = vcmask 516096
        %1004 = vst.msk [vmem:[#allocation2] sm:$0x1] %vm1003, %v1002
        // Predicated region
        $region41: #{tpu_custom_call.1} parent=31 // pred_check
          %p1005 = pneg %p205
        $region42: #{tpu_custom_call.1} parent=31 // pred_check_branch
          %1007 = sbr.rel (%p1005) target = $region44
        $region43: #{tpu_custom_call.1} parent=31 // pred_region
          %v1008 = vld [vmem:[#allocation2] sm:$0x1]
          %v1009 = vmul.f32 %v1008, 0.00390625
          %v1010 = vld [vmem:[%s1] sm:$0xff]
          %v1011 = vld [vmem:[%s1 + $0x8] sm:$0xff]
          %v1012 = vld [vmem:[%s1 + $0x10] sm:$0xff]
          %v1013 = vld [vmem:[%s1 + $0x18] sm:$0xff]
          %v1014 = vld [vmem:[%s1 + $0x20] sm:$0xff]
          %v1015 = vld [vmem:[%s1 + $0x28] sm:$0xff]
          %v1016 = vld [vmem:[%s1 + $0x30] sm:$0xff]
          %v1017 = vld [vmem:[%s1 + $0x38] sm:$0xff]
          %vm1018 = vcmask 523264
          %v1020 = vsel %vm1018, %v1009, 0
          %1022 = vmatprep.subr.mxu0 0.0
          %1023 = vmatpush1.msra.mxu0 %v1010
          %1024 = vmatprep.subr.mxu0 0.0
          %1025 = vmatpush1.msra.mxu0 %v1011
          %1026 = vmatprep.subr.mxu0 0.0
          %1027 = vmatpush1.msra.mxu0 %v1012
          %1028 = vmatprep.subr.mxu0 0.0
          %1029 = vmatpush1.msra.mxu0 %v1013
          %1030 = vmatprep.subr.mxu0 0.0
          %1031 = vmatpush1.msra.mxu0 %v1014
          %1032 = vmatprep.subr.mxu0 0.0
          %1033 = vmatpush1.msra.mxu0 %v1015
          %1034 = vmatprep.subr.mxu0 0.0
          %1035 = vmatpush1.msra.mxu0 %v1016
          %1036 = vmatprep.subr.mxu0 0.0
          %1037 = vmatpush1.msra.mxu0 %v1017
          %1038 = vmatprep.subr.mxu0 0.0
          %1039 = vmatpush1.msra.mxu0 0.0
          %1040 = vmatprep.subr.mxu0 0.0
          %1041 = vmatpush1.msra.mxu0 0.0
          %1042 = vmatprep.subr.mxu0 0.0
          %1043 = vmatpush1.msra.mxu0 0.0
          %1044 = vmatprep.subr.mxu0 0.0
          %1045 = vmatpush1.msra.mxu0 0.0
          %1046 = vmatprep.subr.mxu0 0.0
          %1047 = vmatpush1.msra.mxu0 0.0
          %1048 = vmatprep.subr.mxu0 0.0
          %1049 = vmatpush1.msra.mxu0 0.0
          %1050 = vmatprep.subr.mxu0 0.0
          %1051 = vmatpush1.msra.mxu0 0.0
          %1052 = vmatprep.subr.mxu0 0.0
          %1053 = vmatpush1.msra.mxu0 0.0
          %1054 = vmatprep.subr.mxu0 0.0
          %1055 = vmatpush1.msra.mxu0 0.0
          %1056 = vmatprep.subr.mxu0 0.0
          %1057 = vmatpush1.msra.mxu0 0.0
          %1058 = vmatprep.subr.mxu0 0.0
          %1059 = vmatpush1.msra.mxu0 0.0
          %1060 = vmatprep.subr.mxu0 0.0
          %1061 = vmatpush1.msra.mxu0 0.0
          %1062 = vmatprep.subr.mxu0 0.0
          %1063 = vmatpush1.msra.mxu0 0.0
          %1064 = vmatprep.subr.mxu0 0.0
          %1065 = vmatpush1.msra.mxu0 0.0
          %1066 = vmatprep.subr.mxu0 0.0
          %1067 = vmatpush1.msra.mxu0 0.0
          %1068 = vmatprep.subr.mxu0 0.0
          %1069 = vmatpush1.msra.mxu0 0.0
          %1070 = vmatprep.subr.mxu0 0.0
          %1071 = vmatpush1.msra.mxu0 0.0
          %1072 = vmatprep.subr.mxu0 0.0
          %1073 = vmatpush1.msra.mxu0 0.0
          %1074 = vmatprep.subr.mxu0 0.0
          %1075 = vmatpush1.msra.mxu0 0.0
          %1076 = vmatprep.subr.mxu0 0.0
          %1077 = vmatpush1.msra.mxu0 0.0
          %1078 = vmatprep.subr.mxu0 0.0
          %1079 = vmatpush1.msra.mxu0 0.0
          %1080 = vmatprep.subr.mxu0 0.0
          %1081 = vmatpush1.msra.mxu0 0.0
          %1082 = vmatprep.subr.mxu0 0.0
          %1083 = vmatpush1.msra.mxu0 0.0
          %1084 = vmatprep.subr.mxu0 0.0
          %1085 = vmatpush1.msra.mxu0 0.0
          %1086 = vmatprep.mubr.f32.mxu0 0.0
          %1087 = vmatmul.mubr.f32.gmra.mrb[0].mxu0 %v1020
          %v1088 = vpop.f32.mrb[0].mxu0
          %v1089 = vadd.f32 0.0, %v1088
          %v1090 = vpop.f32.mrb[0].mxu0
          %1091 = vdwg.mxu0
          %v1092 = vmax.f32 %v1089, 0.0
          %v1093 = vld [vmem:[%s2] sm:$0xf]
          %vm1094 = vcmask 31744
          %v1096 = vsel %vm1094, %v1092, 0
          %vm1098 = vcmask 1043456
          %v1100 = vsel %vm1098, %v1093, 0
          %1102 = vmatprep.subr.mxu0 0.0
          %1103 = vmatpush1.msra.mxu0 %v1100
          %1104 = vmatprep.subr.mxu0 0.0
          %1105 = vmatpush1.msra.mxu0 0.0
          %1106 = vmatprep.subr.mxu0 0.0
          %1107 = vmatpush1.msra.mxu0 0.0
          %1108 = vmatprep.subr.mxu0 0.0
          %1109 = vmatpush1.msra.mxu0 0.0
          %1110 = vmatprep.subr.mxu0 0.0
          %1111 = vmatpush1.msra.mxu0 0.0
          %1112 = vmatprep.subr.mxu0 0.0
          %1113 = vmatpush1.msra.mxu0 0.0
          %1114 = vmatprep.subr.mxu0 0.0
          %1115 = vmatpush1.msra.mxu0 0.0
          %1116 = vmatprep.subr.mxu0 0.0
          %1117 = vmatpush1.msra.mxu0 0.0
          %1118 = vmatprep.subr.mxu0 0.0
          %1119 = vmatpush1.msra.mxu0 0.0
          %1120 = vmatprep.subr.mxu0 0.0
          %1121 = vmatpush1.msra.mxu0 0.0
          %1122 = vmatprep.subr.mxu0 0.0
          %1123 = vmatpush1.msra.mxu0 0.0
          %1124 = vmatprep.subr.mxu0 0.0
          %1125 = vmatpush1.msra.mxu0 0.0
          %1126 = vmatprep.subr.mxu0 0.0
          %1127 = vmatpush1.msra.mxu0 0.0
          %1128 = vmatprep.subr.mxu0 0.0
          %1129 = vmatpush1.msra.mxu0 0.0
          %1130 = vmatprep.subr.mxu0 0.0
          %1131 = vmatpush1.msra.mxu0 0.0
          %1132 = vmatprep.subr.mxu0 0.0
          %1133 = vmatpush1.msra.mxu0 0.0
          %1134 = vmatprep.subr.mxu0 0.0
          %1135 = vmatpush1.msra.mxu0 0.0
          %1136 = vmatprep.subr.mxu0 0.0
          %1137 = vmatpush1.msra.mxu0 0.0
          %1138 = vmatprep.subr.mxu0 0.0
          %1139 = vmatpush1.msra.mxu0 0.0
          %1140 = vmatprep.subr.mxu0 0.0
          %1141 = vmatpush1.msra.mxu0 0.0
          %1142 = vmatprep.subr.mxu0 0.0
          %1143 = vmatpush1.msra.mxu0 0.0
          %1144 = vmatprep.subr.mxu0 0.0
          %1145 = vmatpush1.msra.mxu0 0.0
          %1146 = vmatprep.subr.mxu0 0.0
          %1147 = vmatpush1.msra.mxu0 0.0
          %1148 = vmatprep.subr.mxu0 0.0
          %1149 = vmatpush1.msra.mxu0 0.0
          %1150 = vmatprep.subr.mxu0 0.0
          %1151 = vmatpush1.msra.mxu0 0.0
          %1152 = vmatprep.subr.mxu0 0.0
          %1153 = vmatpush1.msra.mxu0 0.0
          %1154 = vmatprep.subr.mxu0 0.0
          %1155 = vmatpush1.msra.mxu0 0.0
          %1156 = vmatprep.subr.mxu0 0.0
          %1157 = vmatpush1.msra.mxu0 0.0
          %1158 = vmatprep.subr.mxu0 0.0
          %1159 = vmatpush1.msra.mxu0 0.0
          %1160 = vmatprep.subr.mxu0 0.0
          %1161 = vmatpush1.msra.mxu0 0.0
          %1162 = vmatprep.subr.mxu0 0.0
          %1163 = vmatpush1.msra.mxu0 0.0
          %1164 = vmatprep.subr.mxu0 0.0
          %1165 = vmatpush1.msra.mxu0 0.0
          %1166 = vmatprep.mubr.f32.mxu0 0.0
          %1167 = vmatmul.mubr.f32.gmra.mrb[0].mxu0 %v1096
          %v1168 = vpop.f32.mrb[0].mxu0
          %v1169 = vadd.f32 0.0, %v1168
          %v1170 = vpop.f32.mrb[0].mxu0
          %1171 = vdwg.mxu0
          %v1172 = vmul.f32 %v1169, 2.0
          %v1173 = vxor.u32 %v1172, 2147483648
          %v1174 = vmul.f32 %v1173, 1.442695
          %v1175 = vpow.pop %v1174
          %v1176 = vadd.f32 %v1175, 1.0
          %v1177 = vrcp.pop %v1176
          %v1178 = vmul.f32 1.0, %v1177
          %1179 = vst.msk [vmem:[%s203] sm:$0x1] %vm1003, %v1178
        $region44: #{tpu_custom_call.1} parent=31 // pred_fallthru
          _
        %s1180 = sand.u32 %s110, 1
        %s1181 = scalar_lea.sflag [#allocation5], %s1180
        %s1182 = sand.u32 %s110, 1
        %s1183 = scalar_lea.vmem [#allocation6], %s1182
        // Predicated region
        $region45: #{tpu_custom_call.1} parent=31 // pred_check
          %p1184 = pneg %p120
        $region46: #{tpu_custom_call.1} parent=31 // pred_check_branch
          %1186 = sbr.rel (%p1184) target = $region48
        $region47: #{tpu_custom_call.1} parent=31 // pred_region
          %s1188 = ssub.s32 16, 16
          %1189 = vsyncadd %s1181, %s1188
          %s1190 = smul.addr %s24, 16
          %s1191 = scalar_lea.hbm %s3, %s1190
          %s1193 = sshll.u32 %s1183, 4
          %s1194 = int_to_ptr.vmem [resolvable:$true] %s1193
          %1196 = dma.vmem_to_hbm [thread:$0]  %s1194, 16, %s1191, %s1181
        $region48: #{tpu_custom_call.1} parent=31 // pred_fallthru
          _
      $region32: #{tpu_custom_call.1} parent=5 // pred_fallthru
        _
      %p1197 = scmp.le.s32.totalorder 2, %s15
      // Predicated region
      $region49: #{tpu_custom_call.1} parent=5 // pred_check
        %p1198 = pneg %p1197
      $region50: #{tpu_custom_call.1} parent=5 // pred_check_branch
        %1200 = sbr.rel (%p1198) target = $region52
      $region51: #{tpu_custom_call.1} parent=5 // pred_region
        %s1201 = ssub.s32 %s15, 2
        // Predicated region
        $region53: #{tpu_custom_call.1} parent=51 // pred_check
          %p1202 = pneg %p126
        $region54: #{tpu_custom_call.1} parent=51 // pred_check_branch
          %1204 = sbr.rel (%p1202) target = $region56
        $region55: #{tpu_custom_call.1} parent=51 // pred_region
          %s1205 = sand.u32 %s111, 1
          %s1206 = scalar_lea.sflag [#allocation5], %s1205
          %s1207 = sand.u32 %s111, 1
          %s1208 = scalar_lea.vmem [#allocation6], %s1207
          %1209 = dma.done %s1206, 16
        $region56: #{tpu_custom_call.1} parent=51 // pred_fallthru
          _
      $region52: #{tpu_custom_call.1} parent=5 // pred_fallthru
        _
    $region6: #{tpu_custom_call.1} parent=1 // loop_footer
      %s19 = sadd.s32 1, %s15
    $region7: #{tpu_custom_call.1} parent=1 // loop_footer_branch
      %14 = sbr.rel target = $region3
    $region8: #{tpu_custom_call.1} parent=1 // loop_exit
      _
    %1210 = vsyncpa [#allocation4], 1
    %s1211 = scalar_lea.sflag [#allocation4], 1
    %1212 = vsyncpa %s1211, 1
    %1213 = vsyncpa [#allocation5], 1
    %s1214 = scalar_lea.sflag [#allocation5], 1
    %1215 = vsyncpa %s1214, 1

</llo_original>
